<compile_context>
chip_gen: v6e
topology: v6e:2x2x1
jax: 0.10.0
libtpu: 0.0.40
codegen_flags: <defaults>
</compile_context>

<pallas_src>
import functools

import jax
import jax.numpy as jnp
from jax.experimental import pallas as pl
from jax.experimental.pallas import tpu as pltpu


def _round_up(v, m):
    return (v + m - 1) // m * m


def _pick_tile_h(H, W, dtype, tile_h=None):
    """Largest multiple-of-8 row tile whose working set fits a ~24 MiB budget.

    Working set = 2 input streams x 2 pipeline buffers x (3, TH, W) native
    blocks + 2 x (3, TH+8, Wp) f32 scratch tiles (+ tiny output buffers).
    The tile is also capped at (H // 8) * 8 so every main block except the
    (standard, partial) last one stays inside the image rows.
    """
    if tile_h is not None:
        assert tile_h >= 8 and tile_h % 8 == 0
        return tile_h
    itemsize = jnp.dtype(dtype).itemsize
    Wp = _round_up(W + 2, 128)
    budget = 24 * 1024 * 1024
    per_row = 2 * 2 * 3 * W * itemsize + 2 * 3 * Wp * 4     # inputs + f32 scratch
    fixed = 2 * 3 * 8 * Wp * 4 + 4 * Wp * 4                  # scratch halo rows + out
    th = (budget - fixed) // per_row
    th = max(8, min(th, 2048))
    cap = max(8, (H // 8) * 8)
    return max(8, (min(th, cap) // 8) * 8)


def _grad_l1_kernel(x_ref, y_ref, out_ref, xw_ref, yw_ref,
                    *, H, W, TH, Wp, NT, REM, E):
    t = pl.program_id(1)

    def grad_mag(top, mid, bot):
        # v[p,q] = x[p,q-1] - x[p-2,q-1];  h[p,q] = x[p-1,q] - x[p-1,q-2].
        # Lane c is output column q = c+1; the circular lane rolls put output
        # column 0 on lane Wp-1, exact because lanes [W, Wp) are kept zero.
        v = top - bot
        h = (pltpu.roll(mid, shift=Wp - 1, axis=2) -
             pltpu.roll(mid, shift=1, axis=2))
        return jnp.sqrt(v * v + h * h + 1e-6)

    @pl.when(t == 0)
    def _init():
        # Once per image: zero the lane padding (data cols are rewritten every
        # step), the 2-row top halo (conv zero padding above the image) and
        # the resident per-image output accumulator.
        for w_ref in (xw_ref, yw_ref):
            w_ref[:, :, W:Wp] = jnp.zeros((3, TH + 8, Wp - W), jnp.float32)
            w_ref[:, 6:8, 0:W] = jnp.zeros((3, 2, W), jnp.float32)
        out_ref[...] = jnp.zeros_like(out_ref)

    @pl.when(t > 0)
    def _carry_halo():
        # Carry the 2-row halo (image rows row0-2, row0-1) from the previous
        # tile's last two main rows before the main region is overwritten.
        xw_ref[:, 6:8, :] = xw_ref[:, TH + 6:TH + 8, :]
        yw_ref[:, 6:8, :] = yw_ref[:, TH + 6:TH + 8, :]

    # Interior fast path: plain (cast +) store, no masks.
    xw_ref[:, 8:8 + TH, 0:W] = x_ref[0].astype(jnp.float32)
    yw_ref[:, 8:8 + TH, 0:W] = y_ref[0].astype(jnp.float32)

    if REM != 0:
        # Only the last main block is partial; its rows >= H have unspecified
        # DMA contents -> zero them so they act as the conv's bottom padding.
        @pl.when(t == NT - 1)
        def _zero_tail_rows():
            z = jnp.zeros((3, TH - REM, W), jnp.float32)
            xw_ref[:, 8 + REM:8 + TH, 0:W] = z
            yw_ref[:, 8 + REM:8 + TH, 0:W] = z

    # Working row 8+k holds image row row0+k; rows 6,7 hold the halo.
    def tile_grad(w_ref):
        return grad_mag(w_ref[:, 8:8 + TH, :],    # image row i      (output row i)
                        w_ref[:, 7:7 + TH, :],    # image row i - 1
                        w_ref[:, 6:6 + TH, :])    # image row i - 2

    d = jnp.abs(tile_grad(xw_ref) - tile_grad(yw_ref))            # (3, TH, Wp)
    out_ref[...] += jnp.sum(d, axis=(0, 1), keepdims=True)        # lane-dense partials

    if E > 0:
        # Fold the last E (1 or 2) padded output rows (p = H, H+1) into the
        # final real tile instead of running an extra fully-masked grid step.
        @pl.when(t == NT - 1)
        def _tail_output_rows():
            r1 = 8 + (H - 1) - (NT - 1) * TH        # working row of image row H-1
            zero = jnp.zeros((3, 1, Wp), jnp.float32)
            if E == 2:
                # p = H:  v = -x[H-2],  h from x[H-1]
                dx = grad_mag(zero, xw_ref[:, r1:r1 + 1, :], xw_ref[:, r1 - 1:r1, :])
                dy = grad_mag(zero, yw_ref[:, r1:r1 + 1, :], yw_ref[:, r1 - 1:r1, :])
                out_ref[...] += jnp.sum(jnp.abs(dx - dy), axis=(0, 1), keepdims=True)
            # p = H+1:  v = -x[H-1],  h = 0
            dx = grad_mag(zero, zero, xw_ref[:, r1:r1 + 1, :])
            dy = grad_mag(zero, zero, yw_ref[:, r1:r1 + 1, :])
            out_ref[...] += jnp.sum(jnp.abs(dx - dy), axis=(0, 1), keepdims=True)


def l1_gradient_loss(x, y, fvalid, *, tile_h=None):
    """x, y: (N, C>=3, H, W) float arrays; fvalid: (N,). Returns the scalar loss."""
    N, C, H, W = x.shape
    assert C >= 3, "Gradient module uses the first 3 channels"
    assert y.shape == x.shape

    TH = _pick_tile_h(H, W, x.dtype, tile_h)
    Wp = _round_up(W + 2, 128)          # lane-dense working width (>= W + 2)
    NT = pl.cdiv(H, TH)                 # exactly the real tiles; no overflow step
    REM = H % TH                        # valid rows in the last main block (0 == full)
    E = max(0, (H + 2) - NT * TH)       # padded output rows folded into the last tile

    main_spec = pl.BlockSpec((1, 3, TH, W), lambda n, t: (n, 0, t, 0))

    itemsize = jnp.dtype(x.dtype).itemsize
    vmem_bytes = (2 * 2 * 3 * TH * W * itemsize       # 2 inputs x 2 pipeline buffers
                  + 2 * 3 * (TH + 8) * Wp * 4         # f32 working scratch
                  + 2 * 2 * Wp * 4)                   # output accumulator buffers
    vmem_limit = int(min(max(vmem_bytes * 5 // 4 + (1 << 20), 16 << 20), 40 << 20))

    kernel = functools.partial(_grad_l1_kernel, H=H, W=W, TH=TH, Wp=Wp,
                               NT=NT, REM=REM, E=E)

    out = pl.pallas_call(
        kernel,
        out_shape=jax.ShapeDtypeStruct((N, 1, Wp), jnp.float32),
        grid_spec=pltpu.PrefetchScalarGridSpec(
            num_scalar_prefetch=0,
            grid=(N, NT),
            in_specs=[main_spec, main_spec],
            out_specs=pl.BlockSpec((1, 1, Wp), lambda n, t: (n, 0, 0)),
            scratch_shapes=[
                pltpu.VMEM((3, TH + 8, Wp), jnp.float32),
                pltpu.VMEM((3, TH + 8, Wp), jnp.float32),
            ]),
        compiler_params=pltpu.CompilerParams(
            dimension_semantics=("parallel", "arbitrary"),
            vmem_limit_bytes=vmem_limit),
    )(x, y)

    # loss.mean(dim=(1,2,3)) over (3, H+2, W+2), then * FVaild, then batch mean.
    sums = jnp.sum(out[:, 0, :], axis=-1)                     # (N,)
    per_batch = sums / jnp.float32(3 * (H + 2) * (W + 2))
    return jnp.mean(per_batch * fvalid.astype(jnp.float32))


def _reference_loss(x, y, fvalid):
    """Pure-JAX reference matching the PyTorch module (for verification)."""
    kv = jnp.array([[0, -1, 0], [0, 0, 0], [0, 1, 0]],
                   jnp.float32).reshape(1, 1, 3, 3)
    kh = jnp.array([[0, 0, 0], [-1, 0, 1], [0, 0, 0]],
                   jnp.float32).reshape(1, 1, 3, 3)
    dn = ('NCHW', 'OIHW', 'NCHW')

    def grad(im):
        chans = []
        for c in range(3):
            xc = im[:, c:c + 1].astype(jnp.float32)
            v = jax.lax.conv_general_dilated(xc, kv, (1, 1), ((2, 2), (2, 2)),
                                             dimension_numbers=dn)
            h = jax.lax.conv_general_dilated(xc, kh, (1, 1), ((2, 2), (2, 2)),
                                             dimension_numbers=dn)
            chans.append(jnp.sqrt(v * v + h * h + 1e-6))
        return jnp.concatenate(chans, axis=1)

    gx, gy = grad(x), grad(y)
    loss = jnp.abs(gx - gy).mean(axis=(1, 2, 3)) * fvalid.astype(jnp.float32)
    return loss.mean()


if __name__ == "__main__":
    key = jax.random.PRNGKey(0)

    # (N, C, H, W, forced tile_h) — exercises: single-tile + 2 tail rows,
    # multi-tile halo carry, partial-last-block masking (E==0), the E==1 tail,
    # and a non-128-multiple width with multiple lane vregs.
    cases = [
        (2, 4, 16, 16, None),    # TH=16, NT=1, REM=0, E=2
        (1, 3, 32, 16, 8),       # NT=4 halo carry, REM=0, E=2
        (1, 3, 20, 16, None),    # TH=16, NT=2, REM=4, E=0 (masking path)
        (1, 3, 15, 16, None),    # TH=8,  NT=2, REM=7, E=1
        (1, 3, 16, 130, 8),      # W=130 (> 128, not a multiple), NT=2, E=2
    ]

    for idx, (N, C, H, W, th) in enumerate(cases):
        kx, ky, kf = jax.random.split(jax.random.fold_in(key, idx), 3)
        x = jax.random.normal(kx, (N, C, H, W), dtype=jnp.float32)
        y = jax.random.normal(ky, (N, C, H, W), dtype=jnp.float32)
        fvalid = jax.random.uniform(kf, (N,), dtype=jnp.float32)

        loss = jax.block_until_ready(l1_gradient_loss(x, y, fvalid, tile_h=th))
        ref = jax.block_until_ready(_reference_loss(x, y, fvalid))
        assert jnp.allclose(loss, ref, rtol=1e-5, atol=1e-5), \
            (idx, (N, C, H, W, th), float(loss), float(ref))

    print("KERNEL_OK")
</pallas_src>

<mosaic_0001>
module attributes {stable_mosaic.version = 11 : i64} {
  func.func @_grad_l1_kernel(%arg0: i32, %arg1: i32, %arg2: memref<1x3x16x16xf32, #tpu.memory_space<vmem>>, %arg3: memref<1x3x16x16xf32, #tpu.memory_space<vmem>>, %arg4: memref<1x1x128xf32, #tpu.memory_space<vmem>>, %arg5: memref<3x24x128xf32, #tpu.memory_space<vmem>>, %arg6: memref<3x24x128xf32, #tpu.memory_space<vmem>>) attributes {dimension_semantics = [#tpu.dimension_semantics<parallel>, #tpu.dimension_semantics<arbitrary>], iteration_bounds = array<i64: 2, 1>, scalar_prefetch = 0 : i64, scratch_operands = 2 : i64, tpu.core_type = #tpu.core_type<tc>, window_params = [{transform_indices = @transform_0, window_bounds = array<i64: 1, 3, 16, 16>}, {transform_indices = @transform_1, window_bounds = array<i64: 1, 3, 16, 16>}, {transform_indices = @transform_2, window_bounds = array<i64: 1, 1, 128>}]} {
    %c0_i32 = arith.constant 0 : i32
    %0 = arith.cmpi eq, %arg1, %c0_i32 : i32
    %1 = arith.extui %0 : i1 to i32
    %c0_i32_0 = arith.constant 0 : i32
    %2 = arith.cmpi ne, %1, %c0_i32_0 : i32
    scf.if %2 {
      %cst_43 = arith.constant 0.000000e+00 : f32
      %48 = vector.broadcast %cst_43 : f32 to vector<3x24x112xf32>
      %c0_44 = arith.constant 0 : index
      %c0_45 = arith.constant 0 : index
      %c16 = arith.constant 16 : index
      %49 = vector.load %arg5[%c0_44, %c0_45, %c16] : memref<3x24x128xf32, #tpu.memory_space<vmem>>, vector<3x24x112xf32>
      tpu.vector_store %arg5[%c0_44, %c0_45, %c16], %48 {strides = array<i32>} : memref<3x24x128xf32, #tpu.memory_space<vmem>>, vector<3x24x112xf32>,
      %cst_46 = arith.constant 0.000000e+00 : f32
      %50 = vector.broadcast %cst_46 : f32 to vector<3x2x16xf32>
      %c0_47 = arith.constant 0 : index
      %c6_48 = arith.constant 6 : index
      %c0_49 = arith.constant 0 : index
      %51 = vector.load %arg5[%c0_47, %c6_48, %c0_49] : memref<3x24x128xf32, #tpu.memory_space<vmem>>, vector<3x2x16xf32>
      tpu.vector_store %arg5[%c0_47, %c6_48, %c0_49], %50 {strides = array<i32>} : memref<3x24x128xf32, #tpu.memory_space<vmem>>, vector<3x2x16xf32>,
      %cst_50 = arith.constant 0.000000e+00 : f32
      %52 = vector.broadcast %cst_50 : f32 to vector<3x24x112xf32>
      %c0_51 = arith.constant 0 : index
      %c0_52 = arith.constant 0 : index
      %c16_53 = arith.constant 16 : index
      %53 = vector.load %arg6[%c0_51, %c0_52, %c16_53] : memref<3x24x128xf32, #tpu.memory_space<vmem>>, vector<3x24x112xf32>
      tpu.vector_store %arg6[%c0_51, %c0_52, %c16_53], %52 {strides = array<i32>} : memref<3x24x128xf32, #tpu.memory_space<vmem>>, vector<3x24x112xf32>,
      %cst_54 = arith.constant 0.000000e+00 : f32
      %54 = vector.broadcast %cst_54 : f32 to vector<3x2x16xf32>
      %c0_55 = arith.constant 0 : index
      %c6_56 = arith.constant 6 : index
      %c0_57 = arith.constant 0 : index
      %55 = vector.load %arg6[%c0_55, %c6_56, %c0_57] : memref<3x24x128xf32, #tpu.memory_space<vmem>>, vector<3x2x16xf32>
      tpu.vector_store %arg6[%c0_55, %c6_56, %c0_57], %54 {strides = array<i32>} : memref<3x24x128xf32, #tpu.memory_space<vmem>>, vector<3x2x16xf32>,
      %cst_58 = arith.constant 0.000000e+00 : f32
      %56 = vector.broadcast %cst_58 : f32 to vector<1x1x128xf32>
      %c0_59 = arith.constant 0 : index
      %c0_60 = arith.constant 0 : index
      %c0_61 = arith.constant 0 : index
      %57 = vector.load %arg4[%c0_59, %c0_60, %c0_61] : memref<1x1x128xf32, #tpu.memory_space<vmem>>, vector<1x1x128xf32>
      tpu.vector_store %arg4[%c0_59, %c0_60, %c0_61], %56 {strides = array<i32>} : memref<1x1x128xf32, #tpu.memory_space<vmem>>, vector<1x1x128xf32>,
    } else {
    }
    %c0_i32_1 = arith.constant 0 : i32
    %3 = arith.cmpi sgt, %arg1, %c0_i32_1 : i32
    %4 = arith.extui %3 : i1 to i32
    %c0_i32_2 = arith.constant 0 : i32
    %5 = arith.cmpi ne, %4, %c0_i32_2 : i32
    scf.if %5 {
      %c0_43 = arith.constant 0 : index
      %c22 = arith.constant 22 : index
      %c0_44 = arith.constant 0 : index
      %48 = vector.load %arg5[%c0_43, %c22, %c0_44] : memref<3x24x128xf32, #tpu.memory_space<vmem>>, vector<3x2x128xf32>
      %c0_45 = arith.constant 0 : index
      %c6_46 = arith.constant 6 : index
      %c0_47 = arith.constant 0 : index
      %49 = vector.load %arg5[%c0_45, %c6_46, %c0_47] : memref<3x24x128xf32, #tpu.memory_space<vmem>>, vector<3x2x128xf32>
      tpu.vector_store %arg5[%c0_45, %c6_46, %c0_47], %48 {strides = array<i32>} : memref<3x24x128xf32, #tpu.memory_space<vmem>>, vector<3x2x128xf32>,
      %c0_48 = arith.constant 0 : index
      %c22_49 = arith.constant 22 : index
      %c0_50 = arith.constant 0 : index
      %50 = vector.load %arg6[%c0_48, %c22_49, %c0_50] : memref<3x24x128xf32, #tpu.memory_space<vmem>>, vector<3x2x128xf32>
      %c0_51 = arith.constant 0 : index
      %c6_52 = arith.constant 6 : index
      %c0_53 = arith.constant 0 : index
      %51 = vector.load %arg6[%c0_51, %c6_52, %c0_53] : memref<3x24x128xf32, #tpu.memory_space<vmem>>, vector<3x2x128xf32>
      tpu.vector_store %arg6[%c0_51, %c6_52, %c0_53], %50 {strides = array<i32>} : memref<3x24x128xf32, #tpu.memory_space<vmem>>, vector<3x2x128xf32>,
    } else {
    }
    %c0 = arith.constant 0 : index
    %c0_3 = arith.constant 0 : index
    %c0_4 = arith.constant 0 : index
    %c0_5 = arith.constant 0 : index
    %6 = vector.load %arg2[%c0, %c0_3, %c0_4, %c0_5] : memref<1x3x16x16xf32, #tpu.memory_space<vmem>>, vector<1x3x16x16xf32>
    %7 = vector.shape_cast %6 : vector<1x3x16x16xf32> to vector<3x16x16xf32>
    %c0_6 = arith.constant 0 : index
    %c8 = arith.constant 8 : index
    %c0_7 = arith.constant 0 : index
    %8 = vector.load %arg5[%c0_6, %c8, %c0_7] : memref<3x24x128xf32, #tpu.memory_space<vmem>>, vector<3x16x16xf32>
    tpu.vector_store %arg5[%c0_6, %c8, %c0_7], %7 {strides = array<i32>} : memref<3x24x128xf32, #tpu.memory_space<vmem>>, vector<3x16x16xf32>,
    %c0_8 = arith.constant 0 : index
    %c0_9 = arith.constant 0 : index
    %c0_10 = arith.constant 0 : index
    %c0_11 = arith.constant 0 : index
    %9 = vector.load %arg3[%c0_8, %c0_9, %c0_10, %c0_11] : memref<1x3x16x16xf32, #tpu.memory_space<vmem>>, vector<1x3x16x16xf32>
    %10 = vector.shape_cast %9 : vector<1x3x16x16xf32> to vector<3x16x16xf32>
    %c0_12 = arith.constant 0 : index
    %c8_13 = arith.constant 8 : index
    %c0_14 = arith.constant 0 : index
    %11 = vector.load %arg6[%c0_12, %c8_13, %c0_14] : memref<3x24x128xf32, #tpu.memory_space<vmem>>, vector<3x16x16xf32>
    tpu.vector_store %arg6[%c0_12, %c8_13, %c0_14], %10 {strides = array<i32>} : memref<3x24x128xf32, #tpu.memory_space<vmem>>, vector<3x16x16xf32>,
    %c0_15 = arith.constant 0 : index
    %c8_16 = arith.constant 8 : index
    %c0_17 = arith.constant 0 : index
    %12 = vector.load %arg5[%c0_15, %c8_16, %c0_17] : memref<3x24x128xf32, #tpu.memory_space<vmem>>, vector<3x16x128xf32>
    %c0_18 = arith.constant 0 : index
    %c7 = arith.constant 7 : index
    %c0_19 = arith.constant 0 : index
    %13 = vector.load %arg5[%c0_18, %c7, %c0_19] : memref<3x24x128xf32, #tpu.memory_space<vmem>>, vector<3x16x128xf32>
    %c0_20 = arith.constant 0 : index
    %c6 = arith.constant 6 : index
    %c0_21 = arith.constant 0 : index
    %14 = vector.load %arg5[%c0_20, %c6, %c0_21] : memref<3x24x128xf32, #tpu.memory_space<vmem>>, vector<3x16x128xf32>
    %15 = arith.subf %12, %14 : vector<3x16x128xf32>
    %c127_i32 = arith.constant 127 : i32
    %16 = tpu.dynamic_rotate %13 by %c127_i32 dim 2 : vector<3x16x128xf32>, i32 -> vector<3x16x128xf32>
    %c1_i32 = arith.constant 1 : i32
    %17 = tpu.dynamic_rotate %13 by %c1_i32 dim 2 : vector<3x16x128xf32>, i32 -> vector<3x16x128xf32>
    %18 = arith.subf %16, %17 : vector<3x16x128xf32>
    %19 = arith.mulf %15, %15 : vector<3x16x128xf32>
    %20 = arith.mulf %18, %18 : vector<3x16x128xf32>
    %21 = arith.addf %19, %20 : vector<3x16x128xf32>
    %cst = arith.constant 9.99999997E-7 : f32
    %22 = vector.broadcast %cst : f32 to vector<3x16x128xf32>
    %23 = arith.addf %21, %22 : vector<3x16x128xf32>
    %24 = math.sqrt %23 : vector<3x16x128xf32>
    %c0_22 = arith.constant 0 : index
    %c8_23 = arith.constant 8 : index
    %c0_24 = arith.constant 0 : index
    %25 = vector.load %arg6[%c0_22, %c8_23, %c0_24] : memref<3x24x128xf32, #tpu.memory_space<vmem>>, vector<3x16x128xf32>
    %c0_25 = arith.constant 0 : index
    %c7_26 = arith.constant 7 : index
    %c0_27 = arith.constant 0 : index
    %26 = vector.load %arg6[%c0_25, %c7_26, %c0_27] : memref<3x24x128xf32, #tpu.memory_space<vmem>>, vector<3x16x128xf32>
    %c0_28 = arith.constant 0 : index
    %c6_29 = arith.constant 6 : index
    %c0_30 = arith.constant 0 : index
    %27 = vector.load %arg6[%c0_28, %c6_29, %c0_30] : memref<3x24x128xf32, #tpu.memory_space<vmem>>, vector<3x16x128xf32>
    %28 = arith.subf %25, %27 : vector<3x16x128xf32>
    %c127_i32_31 = arith.constant 127 : i32
    %29 = tpu.dynamic_rotate %26 by %c127_i32_31 dim 2 : vector<3x16x128xf32>, i32 -> vector<3x16x128xf32>
    %c1_i32_32 = arith.constant 1 : i32
    %30 = tpu.dynamic_rotate %26 by %c1_i32_32 dim 2 : vector<3x16x128xf32>, i32 -> vector<3x16x128xf32>
    %31 = arith.subf %29, %30 : vector<3x16x128xf32>
    %32 = arith.mulf %28, %28 : vector<3x16x128xf32>
    %33 = arith.mulf %31, %31 : vector<3x16x128xf32>
    %34 = arith.addf %32, %33 : vector<3x16x128xf32>
    %cst_33 = arith.constant 9.99999997E-7 : f32
    %35 = vector.broadcast %cst_33 : f32 to vector<3x16x128xf32>
    %36 = arith.addf %34, %35 : vector<3x16x128xf32>
    %37 = math.sqrt %36 : vector<3x16x128xf32>
    %38 = arith.subf %24, %37 : vector<3x16x128xf32>
    %39 = math.absf %38 : vector<3x16x128xf32>
    %c0_34 = arith.constant 0 : index
    %c0_35 = arith.constant 0 : index
    %c0_36 = arith.constant 0 : index
    %40 = vector.load %arg4[%c0_34, %c0_35, %c0_36] : memref<1x1x128xf32, #tpu.memory_space<vmem>>, vector<1x1x128xf32>
    %cst_37 = arith.constant dense<0.000000e+00> : vector<128xf32>
    %41 = vector.multi_reduction <add>, %39, %cst_37 [0, 1] : vector<3x16x128xf32> to vector<128xf32>
    %42 = vector.shape_cast %41 : vector<128xf32> to vector<1x1x128xf32>
    %43 = arith.addf %40, %42 : vector<1x1x128xf32>
    %c0_38 = arith.constant 0 : index
    %c0_39 = arith.constant 0 : index
    %c0_40 = arith.constant 0 : index
    %44 = vector.load %arg4[%c0_38, %c0_39, %c0_40] : memref<1x1x128xf32, #tpu.memory_space<vmem>>, vector<1x1x128xf32>
    tpu.vector_store %arg4[%c0_38, %c0_39, %c0_40], %43 {strides = array<i32>} : memref<1x1x128xf32, #tpu.memory_space<vmem>>, vector<1x1x128xf32>,
    %c0_i32_41 = arith.constant 0 : i32
    %45 = arith.cmpi eq, %arg1, %c0_i32_41 : i32
    %46 = arith.extui %45 : i1 to i32
    %c0_i32_42 = arith.constant 0 : i32
    %47 = arith.cmpi ne, %46, %c0_i32_42 : i32
    scf.if %47 {
      %cst_43 = arith.constant 0.000000e+00 : f32
      %48 = vector.broadcast %cst_43 : f32 to vector<3x1x128xf32>
      %c0_44 = arith.constant 0 : index
      %c23 = arith.constant 23 : index
      %c0_45 = arith.constant 0 : index
      %49 = vector.load %arg5[%c0_44, %c23, %c0_45] : memref<3x24x128xf32, #tpu.memory_space<vmem>>, vector<3x1x128xf32>
      %c0_46 = arith.constant 0 : index
      %c22 = arith.constant 22 : index
      %c0_47 = arith.constant 0 : index
      %50 = vector.load %arg5[%c0_46, %c22, %c0_47] : memref<3x24x128xf32, #tpu.memory_space<vmem>>, vector<3x1x128xf32>
      %51 = arith.subf %48, %50 : vector<3x1x128xf32>
      %c127_i32_48 = arith.constant 127 : i32
      %52 = tpu.dynamic_rotate %49 by %c127_i32_48 dim 2 : vector<3x1x128xf32>, i32 -> vector<3x1x128xf32>
      %c1_i32_49 = arith.constant 1 : i32
      %53 = tpu.dynamic_rotate %49 by %c1_i32_49 dim 2 : vector<3x1x128xf32>, i32 -> vector<3x1x128xf32>
      %54 = arith.subf %52, %53 : vector<3x1x128xf32>
      %55 = arith.mulf %51, %51 : vector<3x1x128xf32>
      %56 = arith.mulf %54, %54 : vector<3x1x128xf32>
      %57 = arith.addf %55, %56 : vector<3x1x128xf32>
      %cst_50 = arith.constant 9.99999997E-7 : f32
      %58 = vector.broadcast %cst_50 : f32 to vector<3x1x128xf32>
      %59 = arith.addf %57, %58 : vector<3x1x128xf32>
      %60 = math.sqrt %59 : vector<3x1x128xf32>
      %c0_51 = arith.constant 0 : index
      %c23_52 = arith.constant 23 : index
      %c0_53 = arith.constant 0 : index
      %61 = vector.load %arg6[%c0_51, %c23_52, %c0_53] : memref<3x24x128xf32, #tpu.memory_space<vmem>>, vector<3x1x128xf32>
      %c0_54 = arith.constant 0 : index
      %c22_55 = arith.constant 22 : index
      %c0_56 = arith.constant 0 : index
      %62 = vector.load %arg6[%c0_54, %c22_55, %c0_56] : memref<3x24x128xf32, #tpu.memory_space<vmem>>, vector<3x1x128xf32>
      %63 = arith.subf %48, %62 : vector<3x1x128xf32>
      %c127_i32_57 = arith.constant 127 : i32
      %64 = tpu.dynamic_rotate %61 by %c127_i32_57 dim 2 : vector<3x1x128xf32>, i32 -> vector<3x1x128xf32>
      %c1_i32_58 = arith.constant 1 : i32
      %65 = tpu.dynamic_rotate %61 by %c1_i32_58 dim 2 : vector<3x1x128xf32>, i32 -> vector<3x1x128xf32>
      %66 = arith.subf %64, %65 : vector<3x1x128xf32>
      %67 = arith.mulf %63, %63 : vector<3x1x128xf32>
      %68 = arith.mulf %66, %66 : vector<3x1x128xf32>
      %69 = arith.addf %67, %68 : vector<3x1x128xf32>
      %cst_59 = arith.constant 9.99999997E-7 : f32
      %70 = vector.broadcast %cst_59 : f32 to vector<3x1x128xf32>
      %71 = arith.addf %69, %70 : vector<3x1x128xf32>
      %72 = math.sqrt %71 : vector<3x1x128xf32>
      %c0_60 = arith.constant 0 : index
      %c0_61 = arith.constant 0 : index
      %c0_62 = arith.constant 0 : index
      %73 = vector.load %arg4[%c0_60, %c0_61, %c0_62] : memref<1x1x128xf32, #tpu.memory_space<vmem>>, vector<1x1x128xf32>
      %74 = arith.subf %60, %72 : vector<3x1x128xf32>
      %75 = math.absf %74 : vector<3x1x128xf32>
      %cst_63 = arith.constant dense<0.000000e+00> : vector<128xf32>
      %76 = vector.multi_reduction <add>, %75, %cst_63 [0, 1] : vector<3x1x128xf32> to vector<128xf32>
      %77 = vector.shape_cast %76 : vector<128xf32> to vector<1x1x128xf32>
      %78 = arith.addf %73, %77 : vector<1x1x128xf32>
      %c0_64 = arith.constant 0 : index
      %c0_65 = arith.constant 0 : index
      %c0_66 = arith.constant 0 : index
      %79 = vector.load %arg4[%c0_64, %c0_65, %c0_66] : memref<1x1x128xf32, #tpu.memory_space<vmem>>, vector<1x1x128xf32>
      tpu.vector_store %arg4[%c0_64, %c0_65, %c0_66], %78 {strides = array<i32>} : memref<1x1x128xf32, #tpu.memory_space<vmem>>, vector<1x1x128xf32>,
      %c0_67 = arith.constant 0 : index
      %c23_68 = arith.constant 23 : index
      %c0_69 = arith.constant 0 : index
      %80 = vector.load %arg5[%c0_67, %c23_68, %c0_69] : memref<3x24x128xf32, #tpu.memory_space<vmem>>, vector<3x1x128xf32>
      %81 = arith.subf %48, %80 : vector<3x1x128xf32>
      %c127_i32_70 = arith.constant 127 : i32
      %82 = tpu.dynamic_rotate %48 by %c127_i32_70 dim 2 : vector<3x1x128xf32>, i32 -> vector<3x1x128xf32>
      %c1_i32_71 = arith.constant 1 : i32
      %83 = tpu.dynamic_rotate %48 by %c1_i32_71 dim 2 : vector<3x1x128xf32>, i32 -> vector<3x1x128xf32>
      %84 = arith.subf %82, %83 : vector<3x1x128xf32>
      %85 = arith.mulf %81, %81 : vector<3x1x128xf32>
      %86 = arith.mulf %84, %84 : vector<3x1x128xf32>
      %87 = arith.addf %85, %86 : vector<3x1x128xf32>
      %cst_72 = arith.constant 9.99999997E-7 : f32
      %88 = vector.broadcast %cst_72 : f32 to vector<3x1x128xf32>
      %89 = arith.addf %87, %88 : vector<3x1x128xf32>
      %90 = math.sqrt %89 : vector<3x1x128xf32>
      %c0_73 = arith.constant 0 : index
      %c23_74 = arith.constant 23 : index
      %c0_75 = arith.constant 0 : index
      %91 = vector.load %arg6[%c0_73, %c23_74, %c0_75] : memref<3x24x128xf32, #tpu.memory_space<vmem>>, vector<3x1x128xf32>
      %92 = arith.subf %48, %91 : vector<3x1x128xf32>
      %c127_i32_76 = arith.constant 127 : i32
      %93 = tpu.dynamic_rotate %48 by %c127_i32_76 dim 2 : vector<3x1x128xf32>, i32 -> vector<3x1x128xf32>
      %c1_i32_77 = arith.constant 1 : i32
      %94 = tpu.dynamic_rotate %48 by %c1_i32_77 dim 2 : vector<3x1x128xf32>, i32 -> vector<3x1x128xf32>
      %95 = arith.subf %93, %94 : vector<3x1x128xf32>
      %96 = arith.mulf %92, %92 : vector<3x1x128xf32>
      %97 = arith.mulf %95, %95 : vector<3x1x128xf32>
      %98 = arith.addf %96, %97 : vector<3x1x128xf32>
      %cst_78 = arith.constant 9.99999997E-7 : f32
      %99 = vector.broadcast %cst_78 : f32 to vector<3x1x128xf32>
      %100 = arith.addf %98, %99 : vector<3x1x128xf32>
      %101 = math.sqrt %100 : vector<3x1x128xf32>
      %c0_79 = arith.constant 0 : index
      %c0_80 = arith.constant 0 : index
      %c0_81 = arith.constant 0 : index
      %102 = vector.load %arg4[%c0_79, %c0_80, %c0_81] : memref<1x1x128xf32, #tpu.memory_space<vmem>>, vector<1x1x128xf32>
      %103 = arith.subf %90, %101 : vector<3x1x128xf32>
      %104 = math.absf %103 : vector<3x1x128xf32>
      %cst_82 = arith.constant dense<0.000000e+00> : vector<128xf32>
      %105 = vector.multi_reduction <add>, %104, %cst_82 [0, 1] : vector<3x1x128xf32> to vector<128xf32>
      %106 = vector.shape_cast %105 : vector<128xf32> to vector<1x1x128xf32>
      %107 = arith.addf %102, %106 : vector<1x1x128xf32>
      %c0_83 = arith.constant 0 : index
      %c0_84 = arith.constant 0 : index
      %c0_85 = arith.constant 0 : index
      %108 = vector.load %arg4[%c0_83, %c0_84, %c0_85] : memref<1x1x128xf32, #tpu.memory_space<vmem>>, vector<1x1x128xf32>
      tpu.vector_store %arg4[%c0_83, %c0_84, %c0_85], %107 {strides = array<i32>} : memref<1x1x128xf32, #tpu.memory_space<vmem>>, vector<1x1x128xf32>,
    } else {
    }
    return
  }
  func.func @transform_0(%arg0: i32, %arg1: i32) -> (i32, i32, i32, i32) {
    %c0_i32 = arith.constant 0 : i32
    %c0_i32_0 = arith.constant 0 : i32
    %c0_i32_1 = arith.constant 0 : i32
    return %arg0, %c0_i32, %arg1, %c0_i32_0 : i32, i32, i32, i32
  }
  func.func @transform_1(%arg0: i32, %arg1: i32) -> (i32, i32, i32, i32) {
    %c0_i32 = arith.constant 0 : i32
    %c0_i32_0 = arith.constant 0 : i32
    %c0_i32_1 = arith.constant 0 : i32
    return %arg0, %c0_i32, %arg1, %c0_i32_0 : i32, i32, i32, i32
  }
  func.func @transform_2(%arg0: i32, %arg1: i32) -> (i32, i32, i32) {
    %c0_i32 = arith.constant 0 : i32
    %c0_i32_0 = arith.constant 0 : i32
    %c0_i32_1 = arith.constant 0 : i32
    return %arg0, %c0_i32, %c0_i32_0 : i32, i32, i32
  }
}

</mosaic_0001>

<llo_original>
// kernel: tpu_custom_call.1
$region0: #{tpu_custom_call.1}
  #allocation0 [shape = 'u32[]', space=smem, size = 0x4, offset = 0x4, fixed_abs, tag = 'smem constant byte address 0x4 - core index']
  #allocation1 [shape = 'u32[144,128]{1,0:T(1,128)}', space=vmem, size = 0x12000, scoped, tag = 'internal scratch']
  #allocation2 [shape = 'f32[3,24,128]{2,1,0:T(8,128)}', space=vmem, size = 0x9000, scoped, tag = 'scratch operand']
  #allocation3 [shape = 'f32[3,24,128]{2,1,0:T(8,128)}', space=vmem, size = 0x9000, scoped, tag = 'scratch operand']
  %s0 = inlined_call_operand.hbm [shape: f32[2,4,16,16], index: 0, kind: input, shape index: {}]
  %s1 = inlined_call_operand.hbm [shape: f32[2,4,16,16], index: 1, kind: input, shape index: {}]
  %s2 = inlined_call_operand.hbm [shape: f32[2,1,128], index: 2, kind: output, shape index: {}]
  %s3 = sld [smem:[#allocation0]]
  $region61: #{tpu_custom_call.1} parent=0
    _
  %s5 = ssub.s32 1, %s3
  %s6 = scalar_select 0, %s5, %s3
  $region1: #{tpu_custom_call.1} parent=0
    #allocation4 [shape = 'u8[49152]{0}', space=vmem, size = 0xc000, scoped, tag = 'input window, operand 0']
    #allocation5 [shape = 's32[2]{0}', space=sflag, size = 0x8, scoped, tag = 'scoped memory for tpu_custom_call.1']
    #allocation6 [shape = 's32[2]{0}', space=sflag, size = 0x8, scoped, tag = 'scoped memory for tpu_custom_call.1']
    #allocation7 [shape = 'u8[49152]{0}', space=vmem, size = 0xc000, scoped, tag = 'input window, operand 1']
    #allocation8 [shape = 's32[2]{0}', space=sflag, size = 0x8, scoped, tag = 'scoped memory for tpu_custom_call.1']
    #allocation9 [shape = 'u8[1024]{0}', space=vmem, size = 0x400, scoped, tag = 'output window, operand 0']
    %7 = vsyncpa [#allocation5], 0
    %s8 = scalar_lea.sflag [#allocation5], 1
    %9 = vsyncpa %s8, 0
    %10 = vsyncpa [#allocation8], 0
    %s11 = scalar_lea.sflag [#allocation8], 1
    %12 = vsyncpa %s11, 0
    %13 = vsyncpa [#allocation6], 0
    %s14 = scalar_lea.sflag [#allocation6], 1
    %15 = vsyncpa %s14, 0
    loop: start=0, step=1, limit=4
    $region2: #{tpu_custom_call.1} parent=1 // loop_pre_header
      _
    $region3: #{tpu_custom_call.1} parent=1 // loop_header
      %s17 = sphi 0, %s21
      %p18 = scmp.ge.s32.totalorder %s17, 4
      %s24 = sphi 0, %s36
      %s25 = sphi 0, %s32
      %s26 = sphi 0, %s24
      %s27 = sphi 0, %s25
      %s28 = sphi 0, %s26
      %s29 = sphi 0, %s27
      %s41 = sphi 0, %s43
      %s44 = sphi 0, %s41
      %s45 = sphi 0, %s44
      %s61 = sphi 0, %s45
      %s69 = sphi 0, %s71
      %s72 = sphi 0, %s69
      %s73 = sphi 0, %s72
      %s89 = sphi 0, %s73
      %s95 = sphi 0, %s97
      %s98 = sphi 0, %s95
      %s99 = sphi 0, %s98
      %s115 = sphi 0, %s99
    $region4: #{tpu_custom_call.1} parent=1 // loop_header_branch
      %20 = sbr.rel (%p18) target = $region8
    $region5: #{tpu_custom_call.1} parent=1 // loop_body
      %s22 = ssub.s32 %s17, 1
      %s23 = ssub.s32 %s17, 2
      %s30 = sadd.s32 1, %s25
      %p31 = scmp.ge.s32.totalorder %s30, 1
      %s32 = scalar_select %p31, 0, %s30
      %s33 = sadd.s32 1, %s24
      %s34 = scalar_select %p31, %s33, %s24
      %p35 = scmp.ge.s32.totalorder %s34, 2
      %s36 = scalar_select %p35, 0, %s34
      %s37 = ssub.s32 %s24, %s36
      %s38 = ssub.s32 %s25, %s32
      %s39 = sor.u32 %s37, %s38
      %p40 = scmp.eq.s32.totalorder %s39, 0
      %s42 = sadd.s32 %s41, 1
      %s43 = scalar_select %p40, %s41, %s42
      %p46 = pneg %p40
      %p47 = scmp.eq.s32.totalorder %s17, 1
      %p48 = por %p46, %p47
      %p49 = scmp.ne.s32.totalorder %s41, %s44
      %p50 = scmp.eq.s32.totalorder %s17, 0
      %p51 = por %p49, %p50
      %p52 = scmp.ne.s32.totalorder %s41, %s44
      %p53 = scmp.eq.s32.totalorder %s22, 1
      %p54 = por %p52, %p53
      %p55 = scmp.ne.s32.totalorder %s44, %s45
      %p56 = scmp.eq.s32.totalorder %s22, 0
      %p57 = por %p55, %p56
      %p58 = scmp.ne.s32.totalorder %s44, %s45
      %p59 = scmp.eq.s32.totalorder %s23, 1
      %p60 = por %p58, %p59
      %p62 = scmp.ne.s32.totalorder %s45, %s61
      %p63 = scmp.eq.s32.totalorder %s23, 0
      %p64 = por %p62, %p63
      %s65 = ssub.s32 %s24, %s36
      %s66 = ssub.s32 %s25, %s32
      %s67 = sor.u32 %s65, %s66
      %p68 = scmp.eq.s32.totalorder %s67, 0
      %s70 = sadd.s32 %s69, 1
      %s71 = scalar_select %p68, %s69, %s70
      %p74 = pneg %p68
      %p75 = scmp.eq.s32.totalorder %s17, 1
      %p76 = por %p74, %p75
      %p77 = scmp.ne.s32.totalorder %s69, %s72
      %p78 = scmp.eq.s32.totalorder %s17, 0
      %p79 = por %p77, %p78
      %p80 = scmp.ne.s32.totalorder %s69, %s72
      %p81 = scmp.eq.s32.totalorder %s22, 1
      %p82 = por %p80, %p81
      %p83 = scmp.ne.s32.totalorder %s72, %s73
      %p84 = scmp.eq.s32.totalorder %s22, 0
      %p85 = por %p83, %p84
      %p86 = scmp.ne.s32.totalorder %s72, %s73
      %p87 = scmp.eq.s32.totalorder %s23, 1
      %p88 = por %p86, %p87
      %p90 = scmp.ne.s32.totalorder %s73, %s89
      %p91 = scmp.eq.s32.totalorder %s23, 0
      %p92 = por %p90, %p91
      %s93 = ssub.s32 %s24, %s36
      %p94 = scmp.eq.s32.totalorder %s93, 0
      %s96 = sadd.s32 %s95, 1
      %s97 = scalar_select %p94, %s95, %s96
      %p100 = pneg %p94
      %p101 = scmp.eq.s32.totalorder %s17, 1
      %p102 = por %p100, %p101
      %p103 = scmp.ne.s32.totalorder %s95, %s98
      %p104 = scmp.eq.s32.totalorder %s17, 0
      %p105 = por %p103, %p104
      %p106 = scmp.ne.s32.totalorder %s95, %s98
      %p107 = scmp.eq.s32.totalorder %s22, 1
      %p108 = por %p106, %p107
      %p109 = scmp.ne.s32.totalorder %s98, %s99
      %p110 = scmp.eq.s32.totalorder %s22, 0
      %p111 = por %p109, %p110
      %p112 = scmp.ne.s32.totalorder %s98, %s99
      %p113 = scmp.eq.s32.totalorder %s23, 1
      %p114 = por %p112, %p113
      %p116 = scmp.ne.s32.totalorder %s99, %s115
      %p117 = scmp.eq.s32.totalorder %s23, 0
      %p118 = por %p116, %p117
      %p119 = scmp.le.s32.totalorder 1, %s17
      %p120 = scmp.lt.s32.totalorder %s17, 3
      %p121 = pnand %p119, %p120
      %p122 = pneg %p121
      // Predicated region
      $region9: #{tpu_custom_call.1} parent=5 // pred_check
        _
      $region10: #{tpu_custom_call.1} parent=5 // pred_check_branch
        %124 = sbr.rel (%p121) target = $region12
      $region11: #{tpu_custom_call.1} parent=5 // pred_region
        %s125 = ssub.s32 %s17, 1
      $region12: #{tpu_custom_call.1} parent=5 // pred_fallthru
        _
      %p126 = scmp.lt.s32.totalorder %s17, 2
      // Predicated region
      $region13: #{tpu_custom_call.1} parent=5 // pred_check
        %p127 = pneg %p126
      $region14: #{tpu_custom_call.1} parent=5 // pred_check_branch
        %129 = sbr.rel (%p127) target = $region16
      $region15: #{tpu_custom_call.1} parent=5 // pred_region
        // Predicated region
        $region17: #{tpu_custom_call.1} parent=15 // pred_check
          %p130 = pneg %p51
        $region18: #{tpu_custom_call.1} parent=15 // pred_check_branch
          %132 = sbr.rel (%p130) target = $region20
        $region19: #{tpu_custom_call.1} parent=15 // pred_region
          %s133 = sand.u32 %s41, 1
          %s134 = scalar_lea.sflag [#allocation5], %s133
          %s135 = sand.u32 %s41, 1
          %s136 = smul.addr %s135, 48
          %s137 = scalar_lea.vmem [#allocation4], %s136
          %s138 = smul.u32 2, %s25
          %s140 = ssub.s32 768, 768
          %141 = vsyncadd %s134, %s140
          %s142 = smul.addr %s24, 8
          %s143 = sadd.s32 %s138, %s142
          %s144 = smul.addr %s143, 128
          %s145 = scalar_lea.hbm %s0, %s144
          %s146 = sshll.u32 %s137, 4
          %s147 = int_to_ptr.vmem [resolvable:$true] %s146
          %152 = dma.hbm_to_vmem [thread:$0]  %s145, 768, %s147, %s134, 128, 128, 8
        $region20: #{tpu_custom_call.1} parent=15 // pred_fallthru
          _
        // Predicated region
        $region21: #{tpu_custom_call.1} parent=15 // pred_check
          %p153 = pneg %p79
        $region22: #{tpu_custom_call.1} parent=15 // pred_check_branch
          %155 = sbr.rel (%p153) target = $region24
        $region23: #{tpu_custom_call.1} parent=15 // pred_region
          %s156 = sand.u32 %s69, 1
          %s157 = scalar_lea.sflag [#allocation8], %s156
          %s158 = sand.u32 %s69, 1
          %s159 = smul.addr %s158, 48
          %s160 = scalar_lea.vmem [#allocation7], %s159
          %s161 = smul.u32 2, %s25
          %s163 = ssub.s32 768, 768
          %164 = vsyncadd %s157, %s163
          %s165 = smul.addr %s24, 8
          %s166 = sadd.s32 %s161, %s165
          %s167 = smul.addr %s166, 128
          %s168 = scalar_lea.hbm %s1, %s167
          %s169 = sshll.u32 %s160, 4
          %s170 = int_to_ptr.vmem [resolvable:$true] %s169
          %175 = dma.hbm_to_vmem [thread:$0]  %s168, 768, %s170, %s157, 128, 128, 8
        $region24: #{tpu_custom_call.1} parent=15 // pred_fallthru
          _
      $region16: #{tpu_custom_call.1} parent=5 // pred_fallthru
        _
      %p176 = scmp.le.s32.totalorder 1, %s17
      %p177 = scmp.lt.s32.totalorder %s17, 3
      %p178 = pnand %p176, %p177
      %p179 = pneg %p178
      // Predicated region
      $region25: #{tpu_custom_call.1} parent=5 // pred_check
        _
      $region26: #{tpu_custom_call.1} parent=5 // pred_check_branch
        %181 = sbr.rel (%p178) target = $region28
      $region27: #{tpu_custom_call.1} parent=5 // pred_region
        %s182 = ssub.s32 %s17, 1
        %s183 = sand.u32 %s44, 1
        %s184 = scalar_lea.sflag [#allocation5], %s183
        %s185 = sand.u32 %s44, 1
        %s186 = smul.addr %s185, 48
        %s187 = scalar_lea.vmem [#allocation4], %s186
        // Predicated region
        $region29: #{tpu_custom_call.1} parent=27 // pred_check
          %p188 = pneg %p57
        $region30: #{tpu_custom_call.1} parent=27 // pred_check_branch
          %190 = sbr.rel (%p188) target = $region32
        $region31: #{tpu_custom_call.1} parent=27 // pred_region
          %191 = dma.done %s184, 768
        $region32: #{tpu_custom_call.1} parent=27 // pred_fallthru
          _
        %s192 = sand.u32 %s72, 1
        %s193 = scalar_lea.sflag [#allocation8], %s192
        %s194 = sand.u32 %s72, 1
        %s195 = smul.addr %s194, 48
        %s196 = scalar_lea.vmem [#allocation7], %s195
        // Predicated region
        $region33: #{tpu_custom_call.1} parent=27 // pred_check
          %p197 = pneg %p85
        $region34: #{tpu_custom_call.1} parent=27 // pred_check_branch
          %199 = sbr.rel (%p197) target = $region36
        $region35: #{tpu_custom_call.1} parent=27 // pred_region
          %200 = dma.done %s193, 768
        $region36: #{tpu_custom_call.1} parent=27 // pred_fallthru
          _
        %s201 = sand.u32 %s44, 1
        %s202 = scalar_lea.sflag [#allocation5], %s201
        %s203 = sand.u32 %s44, 1
        %s204 = smul.addr %s203, 48
        %s205 = scalar_lea.vmem [#allocation4], %s204
        %p206 = pneg %p57
        %p207 = pneg %p54
        %s208 = sand.u32 %s72, 1
        %s209 = scalar_lea.sflag [#allocation8], %s208
        %s210 = sand.u32 %s72, 1
        %s211 = smul.addr %s210, 48
        %s212 = scalar_lea.vmem [#allocation7], %s211
        %p213 = pneg %p85
        %p214 = pneg %p82
        %p215 = pneg %p111
        %p216 = pneg %p108
        %s217 = sand.u32 %s98, 1
        %s218 = scalar_lea.sflag [#allocation6], %s217
        %s219 = sand.u32 %s98, 1
        %s220 = scalar_lea.vmem [#allocation9], %s219
        %s221 = smul.u32 2, %s27
        %s222 = smul.u32 2, %s27
        %p223 = scmp.eq.s32.totalorder %s27, 0
        // Predicated region
        $region37: #{tpu_custom_call.1} parent=27 // pred_check
          %p224 = pneg %p223
        $region38: #{tpu_custom_call.1} parent=27 // pred_check_branch
          %226 = sbr.rel (%p224) target = $region40
        $region39: #{tpu_custom_call.1} parent=27 // pred_region
          %vm227 = vcmask 1047680
          %228 = vst.msk [vmem:[#allocation2] sm:$0xff] %vm227, 0.0
          %229 = vst.msk [vmem:[#allocation2 + $0x8] sm:$0xff] %vm227, 0.0
          %230 = vst.msk [vmem:[#allocation2 + $0x10] sm:$0xff] %vm227, 0.0
          %231 = vst.msk [vmem:[#allocation2 + $0x18] sm:$0xff] %vm227, 0.0
          %232 = vst.msk [vmem:[#allocation2 + $0x20] sm:$0xff] %vm227, 0.0
          %233 = vst.msk [vmem:[#allocation2 + $0x28] sm:$0xff] %vm227, 0.0
          %234 = vst.msk [vmem:[#allocation2 + $0x30] sm:$0xff] %vm227, 0.0
          %235 = vst.msk [vmem:[#allocation2 + $0x38] sm:$0xff] %vm227, 0.0
          %236 = vst.msk [vmem:[#allocation2 + $0x40] sm:$0xff] %vm227, 0.0
          %vm237 = vcmask 123904
          %238 = vst.msk [vmem:[#allocation2 + $0x6] sm:$0x3] %vm237, 0.0
          %239 = vst.msk [vmem:[#allocation2 + $0x1e] sm:$0x3] %vm237, 0.0
          %240 = vst.msk [vmem:[#allocation2 + $0x36] sm:$0x3] %vm237, 0.0
          %241 = vst.msk [vmem:[#allocation3] sm:$0xff] %vm227, 0.0
          %242 = vst.msk [vmem:[#allocation3 + $0x8] sm:$0xff] %vm227, 0.0
          %243 = vst.msk [vmem:[#allocation3 + $0x10] sm:$0xff] %vm227, 0.0
          %244 = vst.msk [vmem:[#allocation3 + $0x18] sm:$0xff] %vm227, 0.0
          %245 = vst.msk [vmem:[#allocation3 + $0x20] sm:$0xff] %vm227, 0.0
          %246 = vst.msk [vmem:[#allocation3 + $0x28] sm:$0xff] %vm227, 0.0
          %247 = vst.msk [vmem:[#allocation3 + $0x30] sm:$0xff] %vm227, 0.0
          %248 = vst.msk [vmem:[#allocation3 + $0x38] sm:$0xff] %vm227, 0.0
          %249 = vst.msk [vmem:[#allocation3 + $0x40] sm:$0xff] %vm227, 0.0
          %250 = vst.msk [vmem:[#allocation3 + $0x6] sm:$0x3] %vm237, 0.0
          %251 = vst.msk [vmem:[#allocation3 + $0x1e] sm:$0x3] %vm237, 0.0
          %252 = vst.msk [vmem:[#allocation3 + $0x36] sm:$0x3] %vm237, 0.0
          %253 = vst [vmem:[%s220] sm:$0x1] 0.0
        $region40: #{tpu_custom_call.1} parent=27 // pred_fallthru
          _
        %p254 = scmp.gt.s32.totalorder %s27, 0
        // Predicated region
        $region41: #{tpu_custom_call.1} parent=27 // pred_check
          %p255 = pneg %p254
        $region42: #{tpu_custom_call.1} parent=27 // pred_check_branch
          %257 = sbr.rel (%p255) target = $region44
        $region43: #{tpu_custom_call.1} parent=27 // pred_region
          %v258 = vld [vmem:[#allocation2 + $0x16] sm:$0x3]
          %v259 = vld [vmem:[#allocation2 + $0x2e] sm:$0x3]
          %v260 = vld [vmem:[#allocation2 + $0x46] sm:$0x3]
          %261 = vst [vmem:[#allocation2 + $0x6] sm:$0x3] %v258
          %262 = vst [vmem:[#allocation2 + $0x1e] sm:$0x3] %v259
          %263 = vst [vmem:[#allocation2 + $0x36] sm:$0x3] %v260
          %v264 = vld [vmem:[#allocation3 + $0x16] sm:$0x3]
          %v265 = vld [vmem:[#allocation3 + $0x2e] sm:$0x3]
          %v266 = vld [vmem:[#allocation3 + $0x46] sm:$0x3]
          %267 = vst [vmem:[#allocation3 + $0x6] sm:$0x3] %v264
          %268 = vst [vmem:[#allocation3 + $0x1e] sm:$0x3] %v265
          %269 = vst [vmem:[#allocation3 + $0x36] sm:$0x3] %v266
        $region44: #{tpu_custom_call.1} parent=27 // pred_fallthru
          _
        %v270 = vld [vmem:[%s187] sm:$0xff]
        %v271 = vld [vmem:[%s187 + $0x8] sm:$0xff]
        %v272 = vld [vmem:[%s187 + $0x10] sm:$0xff]
        %v273 = vld [vmem:[%s187 + $0x18] sm:$0xff]
        %v274 = vld [vmem:[%s187 + $0x20] sm:$0xff]
        %v275 = vld [vmem:[%s187 + $0x28] sm:$0xff]
        %vm276 = vcmask 130048
        %277 = vst.msk [vmem:[#allocation2 + $0x8] sm:$0xff] %vm276, %v270
        %278 = vst.msk [vmem:[#allocation2 + $0x10] sm:$0xff] %vm276, %v271
        %279 = vst.msk [vmem:[#allocation2 + $0x20] sm:$0xff] %vm276, %v272
        %280 = vst.msk [vmem:[#allocation2 + $0x28] sm:$0xff] %vm276, %v273
        %281 = vst.msk [vmem:[#allocation2 + $0x38] sm:$0xff] %vm276, %v274
        %282 = vst.msk [vmem:[#allocation2 + $0x40] sm:$0xff] %vm276, %v275
        %v283 = vld [vmem:[%s196] sm:$0xff]
        %v284 = vld [vmem:[%s196 + $0x8] sm:$0xff]
        %v285 = vld [vmem:[%s196 + $0x10] sm:$0xff]
        %v286 = vld [vmem:[%s196 + $0x18] sm:$0xff]
        %v287 = vld [vmem:[%s196 + $0x20] sm:$0xff]
        %v288 = vld [vmem:[%s196 + $0x28] sm:$0xff]
        %289 = vst.msk [vmem:[#allocation3 + $0x8] sm:$0xff] %vm276, %v283
        %290 = vst.msk [vmem:[#allocation3 + $0x10] sm:$0xff] %vm276, %v284
        %291 = vst.msk [vmem:[#allocation3 + $0x20] sm:$0xff] %vm276, %v285
        %292 = vst.msk [vmem:[#allocation3 + $0x28] sm:$0xff] %vm276, %v286
        %293 = vst.msk [vmem:[#allocation3 + $0x38] sm:$0xff] %vm276, %v287
        %294 = vst.msk [vmem:[#allocation3 + $0x40] sm:$0xff] %vm276, %v288
        %v295 = vld [vmem:[#allocation2 + $0x8] sm:$0xff]
        %v296 = vld [vmem:[#allocation2 + $0x10] sm:$0xff]
        %v297 = vld [vmem:[#allocation2 + $0x20] sm:$0xff]
        %v298 = vld [vmem:[#allocation2 + $0x28] sm:$0xff]
        %v299 = vld [vmem:[#allocation2 + $0x38] sm:$0xff]
        %v300 = vld [vmem:[#allocation2 + $0x40] sm:$0xff]
        %v301 = vld [vmem:[#allocation2 + $0x7] sm:$0xff]
        %v302 = vld [vmem:[#allocation2 + $0xf] sm:$0xff]
        %v303 = vld [vmem:[#allocation2 + $0x1f] sm:$0xff]
        %v304 = vld [vmem:[#allocation2 + $0x27] sm:$0xff]
        %v305 = vld [vmem:[#allocation2 + $0x37] sm:$0xff]
        %v306 = vld [vmem:[#allocation2 + $0x3f] sm:$0xff]
        %v307 = vld [vmem:[#allocation2 + $0x6] sm:$0xff]
        %v308 = vld [vmem:[#allocation2 + $0xe] sm:$0xff]
        %v309 = vld [vmem:[#allocation2 + $0x1e] sm:$0xff]
        %v310 = vld [vmem:[#allocation2 + $0x26] sm:$0xff]
        %v311 = vld [vmem:[#allocation2 + $0x36] sm:$0xff]
        %v312 = vld [vmem:[#allocation2 + $0x3e] sm:$0xff]
        %v313 = vsub.f32 %v295, %v307
        %v314 = vsub.f32 %v296, %v308
        %v315 = vsub.f32 %v297, %v309
        %v316 = vsub.f32 %v298, %v310
        %v317 = vsub.f32 %v299, %v311
        %v318 = vsub.f32 %v300, %v312
        %319 = vrot.lane.b32.xlu0 %v301, 127
        %v320 = vpop.permute.xlu0 %319
        %321 = vrot.lane.b32.xlu0 %v302, 127
        %v322 = vpop.permute.xlu0 %321
        %323 = vrot.lane.b32.xlu0 %v303, 127
        %v324 = vpop.permute.xlu0 %323
        %325 = vrot.lane.b32.xlu0 %v304, 127
        %v326 = vpop.permute.xlu0 %325
        %327 = vrot.lane.b32.xlu0 %v305, 127
        %v328 = vpop.permute.xlu0 %327
        %329 = vrot.lane.b32.xlu0 %v306, 127
        %v330 = vpop.permute.xlu0 %329
        %331 = vrot.lane.b32.xlu0 %v301, 1
        %v332 = vpop.permute.xlu0 %331
        %333 = vrot.lane.b32.xlu0 %v302, 1
        %v334 = vpop.permute.xlu0 %333
        %335 = vrot.lane.b32.xlu0 %v303, 1
        %v336 = vpop.permute.xlu0 %335
        %337 = vrot.lane.b32.xlu0 %v304, 1
        %v338 = vpop.permute.xlu0 %337
        %339 = vrot.lane.b32.xlu0 %v305, 1
        %v340 = vpop.permute.xlu0 %339
        %341 = vrot.lane.b32.xlu0 %v306, 1
        %v342 = vpop.permute.xlu0 %341
        %v343 = vsub.f32 %v320, %v332
        %v344 = vsub.f32 %v322, %v334
        %v345 = vsub.f32 %v324, %v336
        %v346 = vsub.f32 %v326, %v338
        %v347 = vsub.f32 %v328, %v340
        %v348 = vsub.f32 %v330, %v342
        %v349 = vmul.f32 %v313, %v313
        %v350 = vmul.f32 %v314, %v314
        %v351 = vmul.f32 %v315, %v315
        %v352 = vmul.f32 %v316, %v316
        %v353 = vmul.f32 %v317, %v317
        %v354 = vmul.f32 %v318, %v318
        %v355 = vmul.f32 %v343, %v343
        %v356 = vmul.f32 %v344, %v344
        %v357 = vmul.f32 %v345, %v345
        %v358 = vmul.f32 %v346, %v346
        %v359 = vmul.f32 %v347, %v347
        %v360 = vmul.f32 %v348, %v348
        %v361 = vadd.f32 %v349, %v355
        %v362 = vadd.f32 %v350, %v356
        %v363 = vadd.f32 %v351, %v357
        %v364 = vadd.f32 %v352, %v358
        %v365 = vadd.f32 %v353, %v359
        %v366 = vadd.f32 %v354, %v360
        %v367 = vadd.f32 %v361, 1e-06
        %v368 = vadd.f32 %v362, 1e-06
        %v369 = vadd.f32 %v363, 1e-06
        %v370 = vadd.f32 %v364, 1e-06
        %v371 = vadd.f32 %v365, 1e-06
        %v372 = vadd.f32 %v366, 1e-06
        %v373 = vrsqrt.pop %v367
        %v374 = vmul.f32 %v367, %v373
        %vm375 = vcmp.eq.f32.partialorder %v367, inf
        %v376 = vsel %vm375, %v367, %v374
        %vm377 = vcmp.eq.f32.partialorder %v367, 0.0
        %v378 = vand.u32 %v367, 2147483648
        %v379 = vsel %vm377, %v378, %v376
        %v380 = vrsqrt.pop %v368
        %v381 = vmul.f32 %v368, %v380
        %vm382 = vcmp.eq.f32.partialorder %v368, inf
        %v383 = vsel %vm382, %v368, %v381
        %vm384 = vcmp.eq.f32.partialorder %v368, 0.0
        %v385 = vand.u32 %v368, 2147483648
        %v386 = vsel %vm384, %v385, %v383
        %v387 = vrsqrt.pop %v369
        %v388 = vmul.f32 %v369, %v387
        %vm389 = vcmp.eq.f32.partialorder %v369, inf
        %v390 = vsel %vm389, %v369, %v388
        %vm391 = vcmp.eq.f32.partialorder %v369, 0.0
        %v392 = vand.u32 %v369, 2147483648
        %v393 = vsel %vm391, %v392, %v390
        %v394 = vrsqrt.pop %v370
        %v395 = vmul.f32 %v370, %v394
        %vm396 = vcmp.eq.f32.partialorder %v370, inf
        %v397 = vsel %vm396, %v370, %v395
        %vm398 = vcmp.eq.f32.partialorder %v370, 0.0
        %v399 = vand.u32 %v370, 2147483648
        %v400 = vsel %vm398, %v399, %v397
        %v401 = vrsqrt.pop %v371
        %v402 = vmul.f32 %v371, %v401
        %vm403 = vcmp.eq.f32.partialorder %v371, inf
        %v404 = vsel %vm403, %v371, %v402
        %vm405 = vcmp.eq.f32.partialorder %v371, 0.0
        %v406 = vand.u32 %v371, 2147483648
        %v407 = vsel %vm405, %v406, %v404
        %v408 = vrsqrt.pop %v372
        %v409 = vmul.f32 %v372, %v408
        %vm410 = vcmp.eq.f32.partialorder %v372, inf
        %v411 = vsel %vm410, %v372, %v409
        %vm412 = vcmp.eq.f32.partialorder %v372, 0.0
        %v413 = vand.u32 %v372, 2147483648
        %v414 = vsel %vm412, %v413, %v411
        %v415 = vld [vmem:[#allocation3 + $0x8] sm:$0xff]
        %v416 = vld [vmem:[#allocation3 + $0x10] sm:$0xff]
        %v417 = vld [vmem:[#allocation3 + $0x20] sm:$0xff]
        %v418 = vld [vmem:[#allocation3 + $0x28] sm:$0xff]
        %v419 = vld [vmem:[#allocation3 + $0x38] sm:$0xff]
        %v420 = vld [vmem:[#allocation3 + $0x40] sm:$0xff]
        %v421 = vld [vmem:[#allocation3 + $0x7] sm:$0xff]
        %v422 = vld [vmem:[#allocation3 + $0xf] sm:$0xff]
        %v423 = vld [vmem:[#allocation3 + $0x1f] sm:$0xff]
        %v424 = vld [vmem:[#allocation3 + $0x27] sm:$0xff]
        %v425 = vld [vmem:[#allocation3 + $0x37] sm:$0xff]
        %v426 = vld [vmem:[#allocation3 + $0x3f] sm:$0xff]
        %v427 = vld [vmem:[#allocation3 + $0x6] sm:$0xff]
        %v428 = vld [vmem:[#allocation3 + $0xe] sm:$0xff]
        %v429 = vld [vmem:[#allocation3 + $0x1e] sm:$0xff]
        %v430 = vld [vmem:[#allocation3 + $0x26] sm:$0xff]
        %v431 = vld [vmem:[#allocation3 + $0x36] sm:$0xff]
        %v432 = vld [vmem:[#allocation3 + $0x3e] sm:$0xff]
        %v433 = vsub.f32 %v415, %v427
        %v434 = vsub.f32 %v416, %v428
        %v435 = vsub.f32 %v417, %v429
        %v436 = vsub.f32 %v418, %v430
        %v437 = vsub.f32 %v419, %v431
        %v438 = vsub.f32 %v420, %v432
        %439 = vrot.lane.b32.xlu0 %v421, 127
        %v440 = vpop.permute.xlu0 %439
        %441 = vrot.lane.b32.xlu0 %v422, 127
        %v442 = vpop.permute.xlu0 %441
        %443 = vrot.lane.b32.xlu0 %v423, 127
        %v444 = vpop.permute.xlu0 %443
        %445 = vrot.lane.b32.xlu0 %v424, 127
        %v446 = vpop.permute.xlu0 %445
        %447 = vrot.lane.b32.xlu0 %v425, 127
        %v448 = vpop.permute.xlu0 %447
        %449 = vrot.lane.b32.xlu0 %v426, 127
        %v450 = vpop.permute.xlu0 %449
        %451 = vrot.lane.b32.xlu0 %v421, 1
        %v452 = vpop.permute.xlu0 %451
        %453 = vrot.lane.b32.xlu0 %v422, 1
        %v454 = vpop.permute.xlu0 %453
        %455 = vrot.lane.b32.xlu0 %v423, 1
        %v456 = vpop.permute.xlu0 %455
        %457 = vrot.lane.b32.xlu0 %v424, 1
        %v458 = vpop.permute.xlu0 %457
        %459 = vrot.lane.b32.xlu0 %v425, 1
        %v460 = vpop.permute.xlu0 %459
        %461 = vrot.lane.b32.xlu0 %v426, 1
        %v462 = vpop.permute.xlu0 %461
        %v463 = vsub.f32 %v440, %v452
        %v464 = vsub.f32 %v442, %v454
        %v465 = vsub.f32 %v444, %v456
        %v466 = vsub.f32 %v446, %v458
        %v467 = vsub.f32 %v448, %v460
        %v468 = vsub.f32 %v450, %v462
        %v469 = vmul.f32 %v433, %v433
        %v470 = vmul.f32 %v434, %v434
        %v471 = vmul.f32 %v435, %v435
        %v472 = vmul.f32 %v436, %v436
        %v473 = vmul.f32 %v437, %v437
        %v474 = vmul.f32 %v438, %v438
        %v475 = vmul.f32 %v463, %v463
        %v476 = vmul.f32 %v464, %v464
        %v477 = vmul.f32 %v465, %v465
        %v478 = vmul.f32 %v466, %v466
        %v479 = vmul.f32 %v467, %v467
        %v480 = vmul.f32 %v468, %v468
        %v481 = vadd.f32 %v469, %v475
        %v482 = vadd.f32 %v470, %v476
        %v483 = vadd.f32 %v471, %v477
        %v484 = vadd.f32 %v472, %v478
        %v485 = vadd.f32 %v473, %v479
        %v486 = vadd.f32 %v474, %v480
        %v487 = vadd.f32 %v481, 1e-06
        %v488 = vadd.f32 %v482, 1e-06
        %v489 = vadd.f32 %v483, 1e-06
        %v490 = vadd.f32 %v484, 1e-06
        %v491 = vadd.f32 %v485, 1e-06
        %v492 = vadd.f32 %v486, 1e-06
        %v493 = vrsqrt.pop %v487
        %v494 = vmul.f32 %v487, %v493
        %vm495 = vcmp.eq.f32.partialorder %v487, inf
        %v496 = vsel %vm495, %v487, %v494
        %vm497 = vcmp.eq.f32.partialorder %v487, 0.0
        %v498 = vand.u32 %v487, 2147483648
        %v499 = vsel %vm497, %v498, %v496
        %v500 = vrsqrt.pop %v488
        %v501 = vmul.f32 %v488, %v500
        %vm502 = vcmp.eq.f32.partialorder %v488, inf
        %v503 = vsel %vm502, %v488, %v501
        %vm504 = vcmp.eq.f32.partialorder %v488, 0.0
        %v505 = vand.u32 %v488, 2147483648
        %v506 = vsel %vm504, %v505, %v503
        %v507 = vrsqrt.pop %v489
        %v508 = vmul.f32 %v489, %v507
        %vm509 = vcmp.eq.f32.partialorder %v489, inf
        %v510 = vsel %vm509, %v489, %v508
        %vm511 = vcmp.eq.f32.partialorder %v489, 0.0
        %v512 = vand.u32 %v489, 2147483648
        %v513 = vsel %vm511, %v512, %v510
        %v514 = vrsqrt.pop %v490
        %v515 = vmul.f32 %v490, %v514
        %vm516 = vcmp.eq.f32.partialorder %v490, inf
        %v517 = vsel %vm516, %v490, %v515
        %vm518 = vcmp.eq.f32.partialorder %v490, 0.0
        %v519 = vand.u32 %v490, 2147483648
        %v520 = vsel %vm518, %v519, %v517
        %v521 = vrsqrt.pop %v491
        %v522 = vmul.f32 %v491, %v521
        %vm523 = vcmp.eq.f32.partialorder %v491, inf
        %v524 = vsel %vm523, %v491, %v522
        %vm525 = vcmp.eq.f32.partialorder %v491, 0.0
        %v526 = vand.u32 %v491, 2147483648
        %v527 = vsel %vm525, %v526, %v524
        %v528 = vrsqrt.pop %v492
        %v529 = vmul.f32 %v492, %v528
        %vm530 = vcmp.eq.f32.partialorder %v492, inf
        %v531 = vsel %vm530, %v492, %v529
        %vm532 = vcmp.eq.f32.partialorder %v492, 0.0
        %v533 = vand.u32 %v492, 2147483648
        %v534 = vsel %vm532, %v533, %v531
        %v535 = vsub.f32 %v379, %v499
        %v536 = vsub.f32 %v386, %v506
        %v537 = vsub.f32 %v393, %v513
        %v538 = vsub.f32 %v400, %v520
        %v539 = vsub.f32 %v407, %v527
        %v540 = vsub.f32 %v414, %v534
        %v541 = vand.u32 2147483647, %v535
        %v542 = vand.u32 2147483647, %v536
        %v543 = vand.u32 2147483647, %v537
        %v544 = vand.u32 2147483647, %v538
        %v545 = vand.u32 2147483647, %v539
        %v546 = vand.u32 2147483647, %v540
        %v547 = vld [vmem:[%s220] sm:$0x1]
        %v548 = vadd.f32 %v541, %v542
        %v549 = vadd.f32 %v548, %v543
        %v550 = vadd.f32 %v549, %v544
        %v551 = vadd.f32 %v550, %v545
        %v552 = vadd.f32 %v551, %v546
        %v553 = vrot.slane %v552, 4
        %v554 = vadd.f32 %v552, %v553
        %v555 = vrot.slane %v554, 2
        %v556 = vadd.f32 %v554, %v555
        %v557 = vrot.slane %v556, 1
        %v558 = vadd.f32 %v556, %v557
        %v559 = vadd.f32 %v547, %v558
        %560 = vst [vmem:[%s220] sm:$0x1] %v559
        // Predicated region
        $region45: #{tpu_custom_call.1} parent=27 // pred_check
          %p561 = pneg %p223
        $region46: #{tpu_custom_call.1} parent=27 // pred_check_branch
          %563 = sbr.rel (%p561) target = $region48
        $region47: #{tpu_custom_call.1} parent=27 // pred_region
          %v564 = vld [vmem:[#allocation2 + $0x17] sm:$0x1]
          %v565 = vld [vmem:[#allocation2 + $0x2f] sm:$0x1]
          %v566 = vld [vmem:[#allocation2 + $0x47] sm:$0x1]
          %v567 = vld [vmem:[#allocation2 + $0x16] sm:$0x1]
          %v568 = vld [vmem:[#allocation2 + $0x2e] sm:$0x1]
          %v569 = vld [vmem:[#allocation2 + $0x46] sm:$0x1]
          %v570 = vsub.f32 0.0, %v567
          %v571 = vsub.f32 0.0, %v568
          %v572 = vsub.f32 0.0, %v569
          %573 = vrot.lane.b32.xlu0 %v564, 127
          %v574 = vpop.permute.xlu0 %573
          %575 = vrot.lane.b32.xlu0 %v565, 127
          %v576 = vpop.permute.xlu0 %575
          %577 = vrot.lane.b32.xlu0 %v566, 127
          %v578 = vpop.permute.xlu0 %577
          %579 = vrot.lane.b32.xlu0 %v564, 1
          %v580 = vpop.permute.xlu0 %579
          %581 = vrot.lane.b32.xlu0 %v565, 1
          %v582 = vpop.permute.xlu0 %581
          %583 = vrot.lane.b32.xlu0 %v566, 1
          %v584 = vpop.permute.xlu0 %583
          %v585 = vsub.f32 %v574, %v580
          %v586 = vsub.f32 %v576, %v582
          %v587 = vsub.f32 %v578, %v584
          %v588 = vmul.f32 %v570, %v570
          %v589 = vmul.f32 %v571, %v571
          %v590 = vmul.f32 %v572, %v572
          %v591 = vmul.f32 %v585, %v585
          %v592 = vmul.f32 %v586, %v586
          %v593 = vmul.f32 %v587, %v587
          %v594 = vadd.f32 %v588, %v591
          %v595 = vadd.f32 %v589, %v592
          %v596 = vadd.f32 %v590, %v593
          %v597 = vadd.f32 %v594, 1e-06
          %v598 = vadd.f32 %v595, 1e-06
          %v599 = vadd.f32 %v596, 1e-06
          %v600 = vrsqrt.pop %v597
          %v601 = vmul.f32 %v597, %v600
          %vm602 = vcmp.eq.f32.partialorder %v597, inf
          %v603 = vsel %vm602, %v597, %v601
          %vm604 = vcmp.eq.f32.partialorder %v597, 0.0
          %v605 = vand.u32 %v597, 2147483648
          %v606 = vsel %vm604, %v605, %v603
          %v607 = vrsqrt.pop %v598
          %v608 = vmul.f32 %v598, %v607
          %vm609 = vcmp.eq.f32.partialorder %v598, inf
          %v610 = vsel %vm609, %v598, %v608
          %vm611 = vcmp.eq.f32.partialorder %v598, 0.0
          %v612 = vand.u32 %v598, 2147483648
          %v613 = vsel %vm611, %v612, %v610
          %v614 = vrsqrt.pop %v599
          %v615 = vmul.f32 %v599, %v614
          %vm616 = vcmp.eq.f32.partialorder %v599, inf
          %v617 = vsel %vm616, %v599, %v615
          %vm618 = vcmp.eq.f32.partialorder %v599, 0.0
          %v619 = vand.u32 %v599, 2147483648
          %v620 = vsel %vm618, %v619, %v617
          %v621 = vld [vmem:[#allocation3 + $0x17] sm:$0x1]
          %v622 = vld [vmem:[#allocation3 + $0x2f] sm:$0x1]
          %v623 = vld [vmem:[#allocation3 + $0x47] sm:$0x1]
          %v624 = vld [vmem:[#allocation3 + $0x16] sm:$0x1]
          %v625 = vld [vmem:[#allocation3 + $0x2e] sm:$0x1]
          %v626 = vld [vmem:[#allocation3 + $0x46] sm:$0x1]
          %v627 = vsub.f32 0.0, %v624
          %v628 = vsub.f32 0.0, %v625
          %v629 = vsub.f32 0.0, %v626
          %630 = vrot.lane.b32.xlu0 %v621, 127
          %v631 = vpop.permute.xlu0 %630
          %632 = vrot.lane.b32.xlu0 %v622, 127
          %v633 = vpop.permute.xlu0 %632
          %634 = vrot.lane.b32.xlu0 %v623, 127
          %v635 = vpop.permute.xlu0 %634
          %636 = vrot.lane.b32.xlu0 %v621, 1
          %v637 = vpop.permute.xlu0 %636
          %638 = vrot.lane.b32.xlu0 %v622, 1
          %v639 = vpop.permute.xlu0 %638
          %640 = vrot.lane.b32.xlu0 %v623, 1
          %v641 = vpop.permute.xlu0 %640
          %v642 = vsub.f32 %v631, %v637
          %v643 = vsub.f32 %v633, %v639
          %v644 = vsub.f32 %v635, %v641
          %v645 = vmul.f32 %v627, %v627
          %v646 = vmul.f32 %v628, %v628
          %v647 = vmul.f32 %v629, %v629
          %v648 = vmul.f32 %v642, %v642
          %v649 = vmul.f32 %v643, %v643
          %v650 = vmul.f32 %v644, %v644
          %v651 = vadd.f32 %v645, %v648
          %v652 = vadd.f32 %v646, %v649
          %v653 = vadd.f32 %v647, %v650
          %v654 = vadd.f32 %v651, 1e-06
          %v655 = vadd.f32 %v652, 1e-06
          %v656 = vadd.f32 %v653, 1e-06
          %v657 = vrsqrt.pop %v654
          %v658 = vmul.f32 %v654, %v657
          %vm659 = vcmp.eq.f32.partialorder %v654, inf
          %v660 = vsel %vm659, %v654, %v658
          %vm661 = vcmp.eq.f32.partialorder %v654, 0.0
          %v662 = vand.u32 %v654, 2147483648
          %v663 = vsel %vm661, %v662, %v660
          %v664 = vrsqrt.pop %v655
          %v665 = vmul.f32 %v655, %v664
          %vm666 = vcmp.eq.f32.partialorder %v655, inf
          %v667 = vsel %vm666, %v655, %v665
          %vm668 = vcmp.eq.f32.partialorder %v655, 0.0
          %v669 = vand.u32 %v655, 2147483648
          %v670 = vsel %vm668, %v669, %v667
          %v671 = vrsqrt.pop %v656
          %v672 = vmul.f32 %v656, %v671
          %vm673 = vcmp.eq.f32.partialorder %v656, inf
          %v674 = vsel %vm673, %v656, %v672
          %vm675 = vcmp.eq.f32.partialorder %v656, 0.0
          %v676 = vand.u32 %v656, 2147483648
          %v677 = vsel %vm675, %v676, %v674
          %v678 = vld [vmem:[%s220] sm:$0x1]
          %v679 = vsub.f32 %v606, %v663
          %v680 = vsub.f32 %v613, %v670
          %v681 = vsub.f32 %v620, %v677
          %v682 = vand.u32 2147483647, %v679
          %v683 = vand.u32 2147483647, %v680
          %v684 = vand.u32 2147483647, %v681
          %vm685 = vcmask 1040384
          %v686 = vsel %vm685, %v682, 0.0
          %v687 = vsel %vm685, %v683, 0.0
          %v688 = vadd.f32 %v686, %v687
          %v689 = vsel %vm685, %v684, 0.0
          %v690 = vadd.f32 %v688, %v689
          %v691 = vrot.slane %v690, 4
          %v692 = vadd.f32 %v690, %v691
          %v693 = vrot.slane %v692, 2
          %v694 = vadd.f32 %v692, %v693
          %v695 = vrot.slane %v694, 1
          %v696 = vadd.f32 %v694, %v695
          %v697 = vadd.f32 %v678, %v696
          %698 = vst [vmem:[%s220] sm:$0x1] %v697
          %v699 = vld [vmem:[#allocation2 + $0x17] sm:$0x1]
          %v700 = vld [vmem:[#allocation2 + $0x2f] sm:$0x1]
          %v701 = vld [vmem:[#allocation2 + $0x47] sm:$0x1]
          %v702 = vsub.f32 0.0, %v699
          %v703 = vsub.f32 0.0, %v700
          %v704 = vsub.f32 0.0, %v701
          %705 = vrot.lane.b32.xlu0 0.0, 127
          %v706 = vpop.permute.xlu0 %705
          %707 = vrot.lane.b32.xlu0 0.0, 1
          %v708 = vpop.permute.xlu0 %707
          %v709 = vsub.f32 %v706, %v708
          %v710 = vmul.f32 %v702, %v702
          %v711 = vmul.f32 %v703, %v703
          %v712 = vmul.f32 %v704, %v704
          %v713 = vmul.f32 %v709, %v709
          %v714 = vadd.f32 %v710, %v713
          %v715 = vadd.f32 %v711, %v713
          %v716 = vadd.f32 %v712, %v713
          %v717 = vadd.f32 %v714, 1e-06
          %v718 = vadd.f32 %v715, 1e-06
          %v719 = vadd.f32 %v716, 1e-06
          %v720 = vrsqrt.pop %v717
          %v721 = vmul.f32 %v717, %v720
          %vm722 = vcmp.eq.f32.partialorder %v717, inf
          %v723 = vsel %vm722, %v717, %v721
          %vm724 = vcmp.eq.f32.partialorder %v717, 0.0
          %v725 = vand.u32 %v717, 2147483648
          %v726 = vsel %vm724, %v725, %v723
          %v727 = vrsqrt.pop %v718
          %v728 = vmul.f32 %v718, %v727
          %vm729 = vcmp.eq.f32.partialorder %v718, inf
          %v730 = vsel %vm729, %v718, %v728
          %vm731 = vcmp.eq.f32.partialorder %v718, 0.0
          %v732 = vand.u32 %v718, 2147483648
          %v733 = vsel %vm731, %v732, %v730
          %v734 = vrsqrt.pop %v719
          %v735 = vmul.f32 %v719, %v734
          %vm736 = vcmp.eq.f32.partialorder %v719, inf
          %v737 = vsel %vm736, %v719, %v735
          %vm738 = vcmp.eq.f32.partialorder %v719, 0.0
          %v739 = vand.u32 %v719, 2147483648
          %v740 = vsel %vm738, %v739, %v737
          %v741 = vld [vmem:[#allocation3 + $0x17] sm:$0x1]
          %v742 = vld [vmem:[#allocation3 + $0x2f] sm:$0x1]
          %v743 = vld [vmem:[#allocation3 + $0x47] sm:$0x1]
          %v744 = vsub.f32 0.0, %v741
          %v745 = vsub.f32 0.0, %v742
          %v746 = vsub.f32 0.0, %v743
          %v747 = vmul.f32 %v744, %v744
          %v748 = vmul.f32 %v745, %v745
          %v749 = vmul.f32 %v746, %v746
          %v750 = vadd.f32 %v747, %v713
          %v751 = vadd.f32 %v748, %v713
          %v752 = vadd.f32 %v749, %v713
          %v753 = vadd.f32 %v750, 1e-06
          %v754 = vadd.f32 %v751, 1e-06
          %v755 = vadd.f32 %v752, 1e-06
          %v756 = vrsqrt.pop %v753
          %v757 = vmul.f32 %v753, %v756
          %vm758 = vcmp.eq.f32.partialorder %v753, inf
          %v759 = vsel %vm758, %v753, %v757
          %vm760 = vcmp.eq.f32.partialorder %v753, 0.0
          %v761 = vand.u32 %v753, 2147483648
          %v762 = vsel %vm760, %v761, %v759
          %v763 = vrsqrt.pop %v754
          %v764 = vmul.f32 %v754, %v763
          %vm765 = vcmp.eq.f32.partialorder %v754, inf
          %v766 = vsel %vm765, %v754, %v764
          %vm767 = vcmp.eq.f32.partialorder %v754, 0.0
          %v768 = vand.u32 %v754, 2147483648
          %v769 = vsel %vm767, %v768, %v766
          %v770 = vrsqrt.pop %v755
          %v771 = vmul.f32 %v755, %v770
          %vm772 = vcmp.eq.f32.partialorder %v755, inf
          %v773 = vsel %vm772, %v755, %v771
          %vm774 = vcmp.eq.f32.partialorder %v755, 0.0
          %v775 = vand.u32 %v755, 2147483648
          %v776 = vsel %vm774, %v775, %v773
          %v777 = vld [vmem:[%s220] sm:$0x1]
          %v778 = vsub.f32 %v726, %v762
          %v779 = vsub.f32 %v733, %v769
          %v780 = vsub.f32 %v740, %v776
          %v781 = vand.u32 2147483647, %v778
          %v782 = vand.u32 2147483647, %v779
          %v783 = vand.u32 2147483647, %v780
          %v784 = vsel %vm685, %v781, 0.0
          %v785 = vsel %vm685, %v782, 0.0
          %v786 = vadd.f32 %v784, %v785
          %v787 = vsel %vm685, %v783, 0.0
          %v788 = vadd.f32 %v786, %v787
          %v789 = vrot.slane %v788, 4
          %v790 = vadd.f32 %v788, %v789
          %v791 = vrot.slane %v790, 2
          %v792 = vadd.f32 %v790, %v791
          %v793 = vrot.slane %v792, 1
          %v794 = vadd.f32 %v792, %v793
          %v795 = vadd.f32 %v777, %v794
          %796 = vst [vmem:[%s220] sm:$0x1] %v795
        $region48: #{tpu_custom_call.1} parent=27 // pred_fallthru
          _
        %s797 = sand.u32 %s98, 1
        %s798 = scalar_lea.sflag [#allocation6], %s797
        %s799 = sand.u32 %s98, 1
        %s800 = scalar_lea.vmem [#allocation9], %s799
        // Predicated region
        $region49: #{tpu_custom_call.1} parent=27 // pred_check
          %p801 = pneg %p108
        $region50: #{tpu_custom_call.1} parent=27 // pred_check_branch
          %803 = sbr.rel (%p801) target = $region52
        $region51: #{tpu_custom_call.1} parent=27 // pred_region
          %s805 = ssub.s32 16, 16
          %806 = vsyncadd %s798, %s805
          %s807 = smul.addr %s26, 16
          %s808 = scalar_lea.hbm %s2, %s807
          %s810 = sshll.u32 %s800, 4
          %s811 = int_to_ptr.vmem [resolvable:$true] %s810
          %813 = dma.vmem_to_hbm [thread:$0]  %s811, 16, %s808, %s798
        $region52: #{tpu_custom_call.1} parent=27 // pred_fallthru
          _
      $region28: #{tpu_custom_call.1} parent=5 // pred_fallthru
        _
      %p814 = scmp.le.s32.totalorder 2, %s17
      // Predicated region
      $region53: #{tpu_custom_call.1} parent=5 // pred_check
        %p815 = pneg %p814
      $region54: #{tpu_custom_call.1} parent=5 // pred_check_branch
        %817 = sbr.rel (%p815) target = $region56
      $region55: #{tpu_custom_call.1} parent=5 // pred_region
        %s818 = ssub.s32 %s17, 2
        // Predicated region
        $region57: #{tpu_custom_call.1} parent=55 // pred_check
          %p819 = pneg %p114
        $region58: #{tpu_custom_call.1} parent=55 // pred_check_branch
          %821 = sbr.rel (%p819) target = $region60
        $region59: #{tpu_custom_call.1} parent=55 // pred_region
          %s822 = sand.u32 %s99, 1
          %s823 = scalar_lea.sflag [#allocation6], %s822
          %s824 = sand.u32 %s99, 1
          %s825 = scalar_lea.vmem [#allocation9], %s824
          %826 = dma.done %s823, 16
        $region60: #{tpu_custom_call.1} parent=55 // pred_fallthru
          _
      $region56: #{tpu_custom_call.1} parent=5 // pred_fallthru
        _
    $region6: #{tpu_custom_call.1} parent=1 // loop_footer
      %s21 = sadd.s32 1, %s17
    $region7: #{tpu_custom_call.1} parent=1 // loop_footer_branch
      %16 = sbr.rel target = $region3
    $region8: #{tpu_custom_call.1} parent=1 // loop_exit
      _
    %827 = vsyncpa [#allocation5], 1
    %s828 = scalar_lea.sflag [#allocation5], 1
    %829 = vsyncpa %s828, 1
    %830 = vsyncpa [#allocation8], 1
    %s831 = scalar_lea.sflag [#allocation8], 1
    %832 = vsyncpa %s831, 1
    %833 = vsyncpa [#allocation6], 1
    %s834 = scalar_lea.sflag [#allocation6], 1
    %835 = vsyncpa %s834, 1

</llo_original>
